<compile_context>
chip_gen: v7x
topology: tpu7x:2x2x1
jax: 0.10.0
libtpu: 0.0.40
codegen_flags: <defaults>
</compile_context>

<pallas_src>
import functools

import jax
import jax.numpy as jnp
from jax.experimental import pallas as pl
from jax.experimental.pallas import tpu as pltpu

DENSE_HID = 64
EMBED_DIM = 32
USER_HIDS = (64, 32)          # user_hids = [64, 32]
MAX_HIST_LEN = 8
MAX_WISH_LEN = 8
TAG_LEN = 4
DENSE_IN = 3
DENSE_PAD = 8                 # dense features zero-padded 3 -> 8

NUM_BOOKS = 50
NUM_AUTHORS = 10
NUM_LANGS = 5
NUM_TAGS = 20

BATCH = 8
TILE_B_MAX = 512              # max batch tile (footprint stays tiny even on v7x 64 MiB)
OUT_LANES = 8                 # compact score tile width

# Packed weight-slab layout.
# wa : (48, 128) f32
#   rows  0:32 , cols  0: 64  uw1            (user layer-1)
#   rows 32:35 , cols 64:128  dw1            (dense layer-1; input zero-padded 3 -> 8)
#   row  40    , cols  0:128  [ub1 | db1]
#   row  41    , cols  0: 64  [ub2 | db2]
#   row  42    , cols  0: 32  ub3
# wb : (160, 64) f32
#   rows   0: 64, cols  0:32  uw2
#   rows  64:128, cols 32:64  dw2
#   rows 128:160, cols  0:32  uw3
_WA_ROWS = 48
_WB_ROWS = 160
_B1_ROW, _B2_ROW, _B3_ROW = 40, 41, 42


def round_up(x, m):
    return -(-x // m) * m


def two_tower_kernel(ids_ref, dense_ref, tab_ref, wa_ref, wb_ref, out_ref,
                     *, n_user_ids, va_pad):
    # ids_ref  : (TB, N_IDS) int32 — cols [0, n_user_ids) index table section A
    #            (hist books @ +0, wish books @ +NB); the rest index section B
    #            (bid / auth / lang / tags with section-local offsets).
    # dense_ref: (TB, 8)  f32 — dense features zero-padded 3 -> 8
    # tab_ref  : (VA_PAD + VB_PAD, E) f32 — packed, pre-scaled embedding table
    # wa_ref   : (48, 128) f32 — block-diag layer-1 weights + all biases
    # wb_ref   : (160, 64) f32 — block-diag layer-2 weights + uw3
    # out_ref  : (TB, 8)  f32 — score broadcast over 8 lanes
    e = EMBED_DIM
    uh2 = USER_HIDS[1]
    tb, n_ids = ids_ref.shape
    vb_pad = tab_ref.shape[0] - va_pad

    ids = ids_ref[...]

    # Pooled embedding lookups as one-hot count matmuls (counts built on the VPU,
    # gather done by the otherwise-idle MXU against the resident table).
    def pooled(col_lo, col_hi, row_lo, width):
        vocab = jax.lax.broadcasted_iota(jnp.int32, (1, width), 1)
        cnt = jnp.zeros((tb, width), jnp.float32)
        for j in range(col_lo, col_hi):                      # static, unrolled
            cnt = cnt + jnp.where(ids[:, j:j + 1] == vocab, 1.0, 0.0)
        return jnp.dot(cnt, tab_ref[row_lo:row_lo + width, :],
                       preferred_element_type=jnp.float32)

    x_user = pooled(0, n_user_ids, 0, va_pad)                # mean(hist)+mean(wish)
    item_g = pooled(n_user_ids, n_ids, va_pad, vb_pad)       # b_e + a_e + l_e + mean(tag)

    # Static slices of the resident weight/bias slabs.
    w1u = wa_ref[0:e, :]                                     # (32, 128) [uw1 | 0]
    w1d = wa_ref[e:e + DENSE_PAD, :]                         # (8, 128)  [0 | dw1]
    b1 = wa_ref[_B1_ROW:_B1_ROW + 1, :]                      # (1, 128)  [ub1 | db1]
    b2 = wa_ref[_B2_ROW:_B2_ROW + 1, 0:uh2 + e]              # (1, 64)   [ub2 | db2]
    b3 = wa_ref[_B3_ROW:_B3_ROW + 1, 0:e]                    # (1, 32)   ub3
    w2 = wb_ref[0:USER_HIDS[0] + DENSE_HID, :]               # (128, 64) blockdiag(uw2, dw2)
    w3 = wb_ref[USER_HIDS[0] + DENSE_HID:_WB_ROWS, 0:e]      # (32, 32)  uw3

    # Layer 1 (both towers, lane-packed): [user_h1 | dense_h1] = (TB, 128)
    h1 = jnp.dot(x_user, w1u, preferred_element_type=jnp.float32)
    h1 = h1 + jnp.dot(dense_ref[...], w1d, preferred_element_type=jnp.float32)
    h1 = jnp.maximum(h1 + b1, 0.0)

    # Layer 2 (both towers, lane-packed): [user_h2 | d_e] = (TB, 64)
    h2 = jnp.dot(h1, w2, preferred_element_type=jnp.float32) + b2
    u_h = jnp.maximum(h2[:, 0:uh2], 0.0)                     # ReLU only on the user half
    d_e = h2[:, uh2:uh2 + e]                                 # dense item embedding (no ReLU)

    # User layer 3 + tower combine + final dot product.
    u_emb = jnp.dot(u_h, w3, preferred_element_type=jnp.float32) + b3
    i_emb = item_g + d_e
    score = jnp.sum(u_emb * i_emb, axis=1, keepdims=True)    # (TB, 1)
    out_ref[...] = jnp.broadcast_to(score, (tb, OUT_LANES))


def init_params(key):
    ks = jax.random.split(key, 16)
    E = EMBED_DIM

    def emb_table(k, n_rows):
        t = 0.1 * jax.random.normal(k, (n_rows, E), jnp.float32)
        return t.at[0].set(0.0)            # padding_idx=0 -> zero row

    def linear(kw, kb, fan_in, fan_out):
        bound = 1.0 / jnp.sqrt(fan_in)
        w = jax.random.uniform(kw, (fan_in, fan_out), jnp.float32, -bound, bound)
        b = jax.random.uniform(kb, (1, fan_out), jnp.float32, -bound, bound)
        return w, b

    params = {
        "book_emb": emb_table(ks[0], NUM_BOOKS + 1),
        "auth_emb": emb_table(ks[1], NUM_AUTHORS + 1),
        "lang_emb": emb_table(ks[2], NUM_LANGS + 1),
        "tag_emb":  emb_table(ks[3], NUM_TAGS + 1),
    }
    params["dw1"], params["db1"] = linear(ks[4], ks[5], DENSE_IN, DENSE_HID)
    params["dw2"], params["db2"] = linear(ks[6], ks[7], DENSE_HID, E)
    params["uw1"], params["ub1"] = linear(ks[8], ks[9], E, USER_HIDS[0])
    params["uw2"], params["ub2"] = linear(ks[10], ks[11], USER_HIDS[0], USER_HIDS[1])
    params["uw3"], params["ub3"] = linear(ks[12], ks[13], USER_HIDS[1], E)
    return params


def pack_params(params, len_hist, len_wish, len_tag):
    """Pack embedding tables (mean-pool scales baked in) + all MLP weights/biases
    into three small f32 slabs that stay resident in VMEM for the whole grid."""
    E = EMBED_DIM
    book, auth, lang, tag = (params["book_emb"], params["auth_emb"],
                             params["lang_emb"], params["tag_emb"])
    n_book, n_auth, n_lang, n_tag = (book.shape[0], auth.shape[0],
                                     lang.shape[0], tag.shape[0])

    # Section A (user pooled lookup): hist books, wish books.
    off_wish = n_book
    va_pad = round_up(2 * n_book, 8)
    # Section B (item side): bid books, authors, languages, tags (local offsets).
    off_auth = n_book
    off_lang = n_book + n_auth
    off_tag = n_book + n_auth + n_lang
    vb_pad = round_up(n_book + n_auth + n_lang + n_tag, 8)

    tab = jnp.zeros((va_pad + vb_pad, E), jnp.float32)
    tab = tab.at[0:n_book].set(book / len_hist)                       # hist (mean baked in)
    tab = tab.at[off_wish:off_wish + n_book].set(book / len_wish)     # wish
    tab = tab.at[va_pad:va_pad + n_book].set(book)                    # bid
    tab = tab.at[va_pad + off_auth:va_pad + off_auth + n_auth].set(auth)
    tab = tab.at[va_pad + off_lang:va_pad + off_lang + n_lang].set(lang)
    tab = tab.at[va_pad + off_tag:va_pad + off_tag + n_tag].set(tag / len_tag)

    wa = jnp.zeros((_WA_ROWS, 128), jnp.float32)
    wa = wa.at[0:E, 0:USER_HIDS[0]].set(params["uw1"])
    wa = wa.at[E:E + DENSE_IN, USER_HIDS[0]:USER_HIDS[0] + DENSE_HID].set(params["dw1"])
    wa = wa.at[_B1_ROW:_B1_ROW + 1, 0:USER_HIDS[0]].set(params["ub1"])
    wa = wa.at[_B1_ROW:_B1_ROW + 1, USER_HIDS[0]:USER_HIDS[0] + DENSE_HID].set(params["db1"])
    wa = wa.at[_B2_ROW:_B2_ROW + 1, 0:USER_HIDS[1]].set(params["ub2"])
    wa = wa.at[_B2_ROW:_B2_ROW + 1, USER_HIDS[1]:USER_HIDS[1] + E].set(params["db2"])
    wa = wa.at[_B3_ROW:_B3_ROW + 1, 0:E].set(params["ub3"])

    wb = jnp.zeros((_WB_ROWS, USER_HIDS[1] + E), jnp.float32)
    wb = wb.at[0:USER_HIDS[0], 0:USER_HIDS[1]].set(params["uw2"])
    wb = wb.at[USER_HIDS[0]:USER_HIDS[0] + DENSE_HID,
               USER_HIDS[1]:USER_HIDS[1] + E].set(params["dw2"])
    wb = wb.at[USER_HIDS[0] + DENSE_HID:_WB_ROWS, 0:E].set(params["uw3"])

    offsets = dict(off_wish=off_wish, off_auth=off_auth, off_lang=off_lang,
                   off_tag=off_tag, va_pad=va_pad)
    return tab, wa, wb, offsets


def two_tower_forward(params, hist_ids, wish_ids, bid, auth, lang, tags, dense):
    B = hist_ids.shape[0]
    len_h, len_w, len_t = hist_ids.shape[1], wish_ids.shape[1], tags.shape[1]
    n_user_ids = len_h + len_w
    n_ids = n_user_ids + len_t + 3

    tab, wa, wb, off = pack_params(params, len_h, len_w, len_t)
    va_pad = off["va_pad"]

    # One concatenated, offset id tensor: first n_user_ids columns hit table
    # section A (hist/wish books), the rest hit section B (bid/auth/lang/tags).
    ids_all = jnp.concatenate([
        hist_ids,
        wish_ids + off["off_wish"],
        bid[:, None],
        auth[:, None] + off["off_auth"],
        lang[:, None] + off["off_lang"],
        tags + off["off_tag"],
    ], axis=1).astype(jnp.int32)

    # Adaptive batch tile: big enough to amortise the ~0.35 us per-grid-step cost,
    # small enough that tiny batches don't DMA padding, and split into >= 2 grid
    # steps when there is enough work so ("parallel",) can use both TensorCores
    # on v7x.
    b_round = round_up(B, 8)
    tile_b = min(TILE_B_MAX, b_round)
    if b_round >= 256:
        tile_b = min(tile_b, round_up(-(-b_round // 2), 8))
    b_pad = round_up(b_round, tile_b)
    nb_tiles = b_pad // tile_b

    def pad_b(x):
        pad = b_pad - x.shape[0]
        return x if pad == 0 else jnp.pad(x, ((0, pad),) + ((0, 0),) * (x.ndim - 1))

    ids_p = pad_b(ids_all)        # padded rows -> id 0 -> zero table rows (sliced off)
    dense_p = jnp.zeros((b_pad, DENSE_PAD), jnp.float32).at[:B, :DENSE_IN].set(dense)

    kernel = functools.partial(two_tower_kernel, n_user_ids=n_user_ids, va_pad=va_pad)

    in_specs = [
        pl.BlockSpec((tile_b, n_ids), lambda i: (i, 0)),
        pl.BlockSpec((tile_b, DENSE_PAD), lambda i: (i, 0)),
        # Constant index maps -> DMA'd once, resident in VMEM across the grid.
        # (pipeline_mode=pl.Buffered(1) would drop the spare buffer; left at the
        #  default for lowering safety — total resident footprint is < 0.1 MiB.)
        pl.BlockSpec(tab.shape, lambda i: (0, 0)),
        pl.BlockSpec(wa.shape, lambda i: (0, 0)),
        pl.BlockSpec(wb.shape, lambda i: (0, 0)),
    ]
    out_specs = pl.BlockSpec((tile_b, OUT_LANES), lambda i: (i, 0))

    flops = 2 * b_pad * (tab.shape[0] * EMBED_DIM             # pooled-gather matmuls
                         + EMBED_DIM * 128 + DENSE_PAD * 128  # layer 1 (block-diag)
                         + 128 * (USER_HIDS[1] + EMBED_DIM)   # layer 2 (block-diag)
                         + USER_HIDS[1] * EMBED_DIM           # user layer 3
                         + EMBED_DIM)                         # final dot
    bytes_acc = (ids_p.size * 4 + dense_p.size * 4 + tab.size * 4
                 + wa.size * 4 + wb.size * 4 + b_pad * OUT_LANES * 4)

    out = pl.pallas_call(
        kernel,
        grid=(nb_tiles,),
        in_specs=in_specs,
        out_specs=out_specs,
        out_shape=jax.ShapeDtypeStruct((b_pad, OUT_LANES), jnp.float32),
        compiler_params=pltpu.CompilerParams(dimension_semantics=("parallel",)),
        cost_estimate=pl.CostEstimate(flops=flops, transcendentals=0,
                                      bytes_accessed=bytes_acc),
    )(ids_p, dense_p, tab, wa, wb)

    return out[:B, 0:1]


def two_tower_reference(params, hist_ids, wish_ids, bid, auth, lang, tags, dense):
    """Pure-JAX reference replicating the PyTorch forward exactly."""
    h_emb = params["book_emb"][hist_ids].mean(axis=1)
    w_emb = params["book_emb"][wish_ids].mean(axis=1)
    x = h_emb + w_emb
    x = jnp.maximum(x @ params["uw1"] + params["ub1"], 0.0)
    x = jnp.maximum(x @ params["uw2"] + params["ub2"], 0.0)
    u_emb = x @ params["uw3"] + params["ub3"]
    b_e = params["book_emb"][bid]
    a_e = params["auth_emb"][auth]
    l_e = params["lang_emb"][lang]
    t_e = params["tag_emb"][tags].mean(axis=1)
    d = jnp.maximum(dense @ params["dw1"] + params["db1"], 0.0)
    d_e = d @ params["dw2"] + params["db2"]
    i_emb = b_e + a_e + l_e + t_e + d_e
    return jnp.sum(u_emb * i_emb, axis=1, keepdims=True)


if __name__ == "__main__":
    key = jax.random.PRNGKey(0)
    k_params, k_h, k_w, k_b, k_a, k_l, k_t, k_d = jax.random.split(key, 8)
    params = init_params(k_params)

    def make_inputs(b, keys):
        kh, kw, kb, ka, kl, kt, kd = keys
        hist = jax.random.randint(kh, (b, MAX_HIST_LEN), 0, NUM_BOOKS + 1)
        wish = jax.random.randint(kw, (b, MAX_WISH_LEN), 0, NUM_BOOKS + 1)
        bid = jax.random.randint(kb, (b,), 0, NUM_BOOKS + 1)
        auth = jax.random.randint(ka, (b,), 0, NUM_AUTHORS + 1)
        lang = jax.random.randint(kl, (b,), 0, NUM_LANGS + 1)
        tags = jax.random.randint(kt, (b, TAG_LEN), 0, NUM_TAGS + 1)
        dense = jax.random.normal(kd, (b, DENSE_IN), jnp.float32)
        return hist, wish, bid, auth, lang, tags, dense

    # Small batch: single grid step, no padded rows.
    inp = make_inputs(BATCH, (k_h, k_w, k_b, k_a, k_l, k_t, k_d))
    out = jax.block_until_ready(two_tower_forward(params, *inp))
    ref = two_tower_reference(params, *inp)
    assert out.shape == (BATCH, 1)
    assert jnp.allclose(out, ref, atol=5e-4, rtol=5e-4), (out, ref)

    # Larger batch: exercises batch padding and a 2-step grid (both TCs on v7x).
    inp2 = make_inputs(260, tuple(jax.random.split(jax.random.PRNGKey(1), 7)))
    out2 = jax.block_until_ready(two_tower_forward(params, *inp2))
    ref2 = two_tower_reference(params, *inp2)
    assert out2.shape == (260, 1)
    assert jnp.allclose(out2, ref2, atol=5e-4, rtol=5e-4), float(
        jnp.max(jnp.abs(out2 - ref2)))

    print("KERNEL_OK")
</pallas_src>

<mosaic_0001>
module attributes {stable_mosaic.version = 11 : i64} {
  func.func @two_tower_kernel(%arg0: i32, %arg1: memref<8x23xi32, #tpu.memory_space<vmem>>, %arg2: memref<8x8xf32, #tpu.memory_space<vmem>>, %arg3: memref<200x32xf32, #tpu.memory_space<vmem>>, %arg4: memref<48x128xf32, #tpu.memory_space<vmem>>, %arg5: memref<160x64xf32, #tpu.memory_space<vmem>>, %arg6: memref<8x8xf32, #tpu.memory_space<vmem>>) attributes {dimension_semantics = [#tpu.dimension_semantics<parallel>], iteration_bounds = array<i64: 1>, scalar_prefetch = 0 : i64, scratch_operands = 0 : i64, tpu.core_type = #tpu.core_type<tc>, window_params = [{transform_indices = @transform_0, window_bounds = array<i64: 8, 23>}, {transform_indices = @transform_1, window_bounds = array<i64: 8, 8>}, {pipeline_mode = #tpu.pipeline_mode<synchronous>, transform_indices = @transform_2, window_bounds = array<i64: 200, 32>}, {pipeline_mode = #tpu.pipeline_mode<synchronous>, transform_indices = @transform_3, window_bounds = array<i64: 48, 128>}, {pipeline_mode = #tpu.pipeline_mode<synchronous>, transform_indices = @transform_4, window_bounds = array<i64: 160, 64>}, {transform_indices = @transform_5, window_bounds = array<i64: 8, 8>}]} {
    %c0 = arith.constant 0 : index
    %c0_0 = arith.constant 0 : index
    %0 = vector.load %arg1[%c0, %c0_0] : memref<8x23xi32, #tpu.memory_space<vmem>>, vector<8x23xi32>
    %1 = tpu.iota {dimensions = array<i32: 1>} : vector<1x104xi32>
    %cst = arith.constant 0.000000e+00 : f32
    %2 = vector.broadcast %cst : f32 to vector<8x104xf32>
    %3 = vector.extract_strided_slice %0 {offsets = [0, 0], sizes = [8, 1], strides = [1, 1]} : vector<8x23xi32> to vector<8x1xi32>
    %4 = vector.broadcast %3 : vector<8x1xi32> to vector<8x104xi32>
    %5 = vector.broadcast %1 : vector<1x104xi32> to vector<8x104xi32>
    %6 = arith.cmpi eq, %4, %5 : vector<8x104xi32>
    %cst_1 = arith.constant 1.000000e+00 : f32
    %cst_2 = arith.constant 0.000000e+00 : f32
    %7 = vector.broadcast %cst_1 : f32 to vector<8x104xf32>
    %8 = vector.broadcast %cst_2 : f32 to vector<8x104xf32>
    %9 = arith.select %6, %7, %8 : vector<8x104xi1>, vector<8x104xf32>
    %10 = arith.addf %2, %9 : vector<8x104xf32>
    %11 = vector.extract_strided_slice %0 {offsets = [0, 1], sizes = [8, 1], strides = [1, 1]} : vector<8x23xi32> to vector<8x1xi32>
    %12 = vector.broadcast %11 : vector<8x1xi32> to vector<8x104xi32>
    %13 = vector.broadcast %1 : vector<1x104xi32> to vector<8x104xi32>
    %14 = arith.cmpi eq, %12, %13 : vector<8x104xi32>
    %cst_3 = arith.constant 1.000000e+00 : f32
    %cst_4 = arith.constant 0.000000e+00 : f32
    %15 = vector.broadcast %cst_3 : f32 to vector<8x104xf32>
    %16 = vector.broadcast %cst_4 : f32 to vector<8x104xf32>
    %17 = arith.select %14, %15, %16 : vector<8x104xi1>, vector<8x104xf32>
    %18 = arith.addf %10, %17 : vector<8x104xf32>
    %19 = vector.extract_strided_slice %0 {offsets = [0, 2], sizes = [8, 1], strides = [1, 1]} : vector<8x23xi32> to vector<8x1xi32>
    %20 = vector.broadcast %19 : vector<8x1xi32> to vector<8x104xi32>
    %21 = vector.broadcast %1 : vector<1x104xi32> to vector<8x104xi32>
    %22 = arith.cmpi eq, %20, %21 : vector<8x104xi32>
    %cst_5 = arith.constant 1.000000e+00 : f32
    %cst_6 = arith.constant 0.000000e+00 : f32
    %23 = vector.broadcast %cst_5 : f32 to vector<8x104xf32>
    %24 = vector.broadcast %cst_6 : f32 to vector<8x104xf32>
    %25 = arith.select %22, %23, %24 : vector<8x104xi1>, vector<8x104xf32>
    %26 = arith.addf %18, %25 : vector<8x104xf32>
    %27 = vector.extract_strided_slice %0 {offsets = [0, 3], sizes = [8, 1], strides = [1, 1]} : vector<8x23xi32> to vector<8x1xi32>
    %28 = vector.broadcast %27 : vector<8x1xi32> to vector<8x104xi32>
    %29 = vector.broadcast %1 : vector<1x104xi32> to vector<8x104xi32>
    %30 = arith.cmpi eq, %28, %29 : vector<8x104xi32>
    %cst_7 = arith.constant 1.000000e+00 : f32
    %cst_8 = arith.constant 0.000000e+00 : f32
    %31 = vector.broadcast %cst_7 : f32 to vector<8x104xf32>
    %32 = vector.broadcast %cst_8 : f32 to vector<8x104xf32>
    %33 = arith.select %30, %31, %32 : vector<8x104xi1>, vector<8x104xf32>
    %34 = arith.addf %26, %33 : vector<8x104xf32>
    %35 = vector.extract_strided_slice %0 {offsets = [0, 4], sizes = [8, 1], strides = [1, 1]} : vector<8x23xi32> to vector<8x1xi32>
    %36 = vector.broadcast %35 : vector<8x1xi32> to vector<8x104xi32>
    %37 = vector.broadcast %1 : vector<1x104xi32> to vector<8x104xi32>
    %38 = arith.cmpi eq, %36, %37 : vector<8x104xi32>
    %cst_9 = arith.constant 1.000000e+00 : f32
    %cst_10 = arith.constant 0.000000e+00 : f32
    %39 = vector.broadcast %cst_9 : f32 to vector<8x104xf32>
    %40 = vector.broadcast %cst_10 : f32 to vector<8x104xf32>
    %41 = arith.select %38, %39, %40 : vector<8x104xi1>, vector<8x104xf32>
    %42 = arith.addf %34, %41 : vector<8x104xf32>
    %43 = vector.extract_strided_slice %0 {offsets = [0, 5], sizes = [8, 1], strides = [1, 1]} : vector<8x23xi32> to vector<8x1xi32>
    %44 = vector.broadcast %43 : vector<8x1xi32> to vector<8x104xi32>
    %45 = vector.broadcast %1 : vector<1x104xi32> to vector<8x104xi32>
    %46 = arith.cmpi eq, %44, %45 : vector<8x104xi32>
    %cst_11 = arith.constant 1.000000e+00 : f32
    %cst_12 = arith.constant 0.000000e+00 : f32
    %47 = vector.broadcast %cst_11 : f32 to vector<8x104xf32>
    %48 = vector.broadcast %cst_12 : f32 to vector<8x104xf32>
    %49 = arith.select %46, %47, %48 : vector<8x104xi1>, vector<8x104xf32>
    %50 = arith.addf %42, %49 : vector<8x104xf32>
    %51 = vector.extract_strided_slice %0 {offsets = [0, 6], sizes = [8, 1], strides = [1, 1]} : vector<8x23xi32> to vector<8x1xi32>
    %52 = vector.broadcast %51 : vector<8x1xi32> to vector<8x104xi32>
    %53 = vector.broadcast %1 : vector<1x104xi32> to vector<8x104xi32>
    %54 = arith.cmpi eq, %52, %53 : vector<8x104xi32>
    %cst_13 = arith.constant 1.000000e+00 : f32
    %cst_14 = arith.constant 0.000000e+00 : f32
    %55 = vector.broadcast %cst_13 : f32 to vector<8x104xf32>
    %56 = vector.broadcast %cst_14 : f32 to vector<8x104xf32>
    %57 = arith.select %54, %55, %56 : vector<8x104xi1>, vector<8x104xf32>
    %58 = arith.addf %50, %57 : vector<8x104xf32>
    %59 = vector.extract_strided_slice %0 {offsets = [0, 7], sizes = [8, 1], strides = [1, 1]} : vector<8x23xi32> to vector<8x1xi32>
    %60 = vector.broadcast %59 : vector<8x1xi32> to vector<8x104xi32>
    %61 = vector.broadcast %1 : vector<1x104xi32> to vector<8x104xi32>
    %62 = arith.cmpi eq, %60, %61 : vector<8x104xi32>
    %cst_15 = arith.constant 1.000000e+00 : f32
    %cst_16 = arith.constant 0.000000e+00 : f32
    %63 = vector.broadcast %cst_15 : f32 to vector<8x104xf32>
    %64 = vector.broadcast %cst_16 : f32 to vector<8x104xf32>
    %65 = arith.select %62, %63, %64 : vector<8x104xi1>, vector<8x104xf32>
    %66 = arith.addf %58, %65 : vector<8x104xf32>
    %67 = vector.extract_strided_slice %0 {offsets = [0, 8], sizes = [8, 1], strides = [1, 1]} : vector<8x23xi32> to vector<8x1xi32>
    %68 = vector.broadcast %67 : vector<8x1xi32> to vector<8x104xi32>
    %69 = vector.broadcast %1 : vector<1x104xi32> to vector<8x104xi32>
    %70 = arith.cmpi eq, %68, %69 : vector<8x104xi32>
    %cst_17 = arith.constant 1.000000e+00 : f32
    %cst_18 = arith.constant 0.000000e+00 : f32
    %71 = vector.broadcast %cst_17 : f32 to vector<8x104xf32>
    %72 = vector.broadcast %cst_18 : f32 to vector<8x104xf32>
    %73 = arith.select %70, %71, %72 : vector<8x104xi1>, vector<8x104xf32>
    %74 = arith.addf %66, %73 : vector<8x104xf32>
    %75 = vector.extract_strided_slice %0 {offsets = [0, 9], sizes = [8, 1], strides = [1, 1]} : vector<8x23xi32> to vector<8x1xi32>
    %76 = vector.broadcast %75 : vector<8x1xi32> to vector<8x104xi32>
    %77 = vector.broadcast %1 : vector<1x104xi32> to vector<8x104xi32>
    %78 = arith.cmpi eq, %76, %77 : vector<8x104xi32>
    %cst_19 = arith.constant 1.000000e+00 : f32
    %cst_20 = arith.constant 0.000000e+00 : f32
    %79 = vector.broadcast %cst_19 : f32 to vector<8x104xf32>
    %80 = vector.broadcast %cst_20 : f32 to vector<8x104xf32>
    %81 = arith.select %78, %79, %80 : vector<8x104xi1>, vector<8x104xf32>
    %82 = arith.addf %74, %81 : vector<8x104xf32>
    %83 = vector.extract_strided_slice %0 {offsets = [0, 10], sizes = [8, 1], strides = [1, 1]} : vector<8x23xi32> to vector<8x1xi32>
    %84 = vector.broadcast %83 : vector<8x1xi32> to vector<8x104xi32>
    %85 = vector.broadcast %1 : vector<1x104xi32> to vector<8x104xi32>
    %86 = arith.cmpi eq, %84, %85 : vector<8x104xi32>
    %cst_21 = arith.constant 1.000000e+00 : f32
    %cst_22 = arith.constant 0.000000e+00 : f32
    %87 = vector.broadcast %cst_21 : f32 to vector<8x104xf32>
    %88 = vector.broadcast %cst_22 : f32 to vector<8x104xf32>
    %89 = arith.select %86, %87, %88 : vector<8x104xi1>, vector<8x104xf32>
    %90 = arith.addf %82, %89 : vector<8x104xf32>
    %91 = vector.extract_strided_slice %0 {offsets = [0, 11], sizes = [8, 1], strides = [1, 1]} : vector<8x23xi32> to vector<8x1xi32>
    %92 = vector.broadcast %91 : vector<8x1xi32> to vector<8x104xi32>
    %93 = vector.broadcast %1 : vector<1x104xi32> to vector<8x104xi32>
    %94 = arith.cmpi eq, %92, %93 : vector<8x104xi32>
    %cst_23 = arith.constant 1.000000e+00 : f32
    %cst_24 = arith.constant 0.000000e+00 : f32
    %95 = vector.broadcast %cst_23 : f32 to vector<8x104xf32>
    %96 = vector.broadcast %cst_24 : f32 to vector<8x104xf32>
    %97 = arith.select %94, %95, %96 : vector<8x104xi1>, vector<8x104xf32>
    %98 = arith.addf %90, %97 : vector<8x104xf32>
    %99 = vector.extract_strided_slice %0 {offsets = [0, 12], sizes = [8, 1], strides = [1, 1]} : vector<8x23xi32> to vector<8x1xi32>
    %100 = vector.broadcast %99 : vector<8x1xi32> to vector<8x104xi32>
    %101 = vector.broadcast %1 : vector<1x104xi32> to vector<8x104xi32>
    %102 = arith.cmpi eq, %100, %101 : vector<8x104xi32>
    %cst_25 = arith.constant 1.000000e+00 : f32
    %cst_26 = arith.constant 0.000000e+00 : f32
    %103 = vector.broadcast %cst_25 : f32 to vector<8x104xf32>
    %104 = vector.broadcast %cst_26 : f32 to vector<8x104xf32>
    %105 = arith.select %102, %103, %104 : vector<8x104xi1>, vector<8x104xf32>
    %106 = arith.addf %98, %105 : vector<8x104xf32>
    %107 = vector.extract_strided_slice %0 {offsets = [0, 13], sizes = [8, 1], strides = [1, 1]} : vector<8x23xi32> to vector<8x1xi32>
    %108 = vector.broadcast %107 : vector<8x1xi32> to vector<8x104xi32>
    %109 = vector.broadcast %1 : vector<1x104xi32> to vector<8x104xi32>
    %110 = arith.cmpi eq, %108, %109 : vector<8x104xi32>
    %cst_27 = arith.constant 1.000000e+00 : f32
    %cst_28 = arith.constant 0.000000e+00 : f32
    %111 = vector.broadcast %cst_27 : f32 to vector<8x104xf32>
    %112 = vector.broadcast %cst_28 : f32 to vector<8x104xf32>
    %113 = arith.select %110, %111, %112 : vector<8x104xi1>, vector<8x104xf32>
    %114 = arith.addf %106, %113 : vector<8x104xf32>
    %115 = vector.extract_strided_slice %0 {offsets = [0, 14], sizes = [8, 1], strides = [1, 1]} : vector<8x23xi32> to vector<8x1xi32>
    %116 = vector.broadcast %115 : vector<8x1xi32> to vector<8x104xi32>
    %117 = vector.broadcast %1 : vector<1x104xi32> to vector<8x104xi32>
    %118 = arith.cmpi eq, %116, %117 : vector<8x104xi32>
    %cst_29 = arith.constant 1.000000e+00 : f32
    %cst_30 = arith.constant 0.000000e+00 : f32
    %119 = vector.broadcast %cst_29 : f32 to vector<8x104xf32>
    %120 = vector.broadcast %cst_30 : f32 to vector<8x104xf32>
    %121 = arith.select %118, %119, %120 : vector<8x104xi1>, vector<8x104xf32>
    %122 = arith.addf %114, %121 : vector<8x104xf32>
    %123 = vector.extract_strided_slice %0 {offsets = [0, 15], sizes = [8, 1], strides = [1, 1]} : vector<8x23xi32> to vector<8x1xi32>
    %124 = vector.broadcast %123 : vector<8x1xi32> to vector<8x104xi32>
    %125 = vector.broadcast %1 : vector<1x104xi32> to vector<8x104xi32>
    %126 = arith.cmpi eq, %124, %125 : vector<8x104xi32>
    %cst_31 = arith.constant 1.000000e+00 : f32
    %cst_32 = arith.constant 0.000000e+00 : f32
    %127 = vector.broadcast %cst_31 : f32 to vector<8x104xf32>
    %128 = vector.broadcast %cst_32 : f32 to vector<8x104xf32>
    %129 = arith.select %126, %127, %128 : vector<8x104xi1>, vector<8x104xf32>
    %130 = arith.addf %122, %129 : vector<8x104xf32>
    %c0_33 = arith.constant 0 : index
    %c0_34 = arith.constant 0 : index
    %131 = vector.load %arg3[%c0_33, %c0_34] : memref<200x32xf32, #tpu.memory_space<vmem>>, vector<104x32xf32>
    %cst_35 = arith.constant dense<0.000000e+00> : vector<8x32xf32>
    %132 = tpu.matmul %130, %131, %cst_35 {dimension_numbers = #tpu.dot_dimension_numbers<[1], [0], [0], [1], [0, 0, 1, 1], [], []>} : vector<8x104xf32>, vector<104x32xf32>, vector<8x32xf32> -> vector<8x32xf32>
    %133 = tpu.iota {dimensions = array<i32: 1>} : vector<1x96xi32>
    %cst_36 = arith.constant 0.000000e+00 : f32
    %134 = vector.broadcast %cst_36 : f32 to vector<8x96xf32>
    %135 = vector.extract_strided_slice %0 {offsets = [0, 16], sizes = [8, 1], strides = [1, 1]} : vector<8x23xi32> to vector<8x1xi32>
    %136 = vector.broadcast %135 : vector<8x1xi32> to vector<8x96xi32>
    %137 = vector.broadcast %133 : vector<1x96xi32> to vector<8x96xi32>
    %138 = arith.cmpi eq, %136, %137 : vector<8x96xi32>
    %cst_37 = arith.constant 1.000000e+00 : f32
    %cst_38 = arith.constant 0.000000e+00 : f32
    %139 = vector.broadcast %cst_37 : f32 to vector<8x96xf32>
    %140 = vector.broadcast %cst_38 : f32 to vector<8x96xf32>
    %141 = arith.select %138, %139, %140 : vector<8x96xi1>, vector<8x96xf32>
    %142 = arith.addf %134, %141 : vector<8x96xf32>
    %143 = vector.extract_strided_slice %0 {offsets = [0, 17], sizes = [8, 1], strides = [1, 1]} : vector<8x23xi32> to vector<8x1xi32>
    %144 = vector.broadcast %143 : vector<8x1xi32> to vector<8x96xi32>
    %145 = vector.broadcast %133 : vector<1x96xi32> to vector<8x96xi32>
    %146 = arith.cmpi eq, %144, %145 : vector<8x96xi32>
    %cst_39 = arith.constant 1.000000e+00 : f32
    %cst_40 = arith.constant 0.000000e+00 : f32
    %147 = vector.broadcast %cst_39 : f32 to vector<8x96xf32>
    %148 = vector.broadcast %cst_40 : f32 to vector<8x96xf32>
    %149 = arith.select %146, %147, %148 : vector<8x96xi1>, vector<8x96xf32>
    %150 = arith.addf %142, %149 : vector<8x96xf32>
    %151 = vector.extract_strided_slice %0 {offsets = [0, 18], sizes = [8, 1], strides = [1, 1]} : vector<8x23xi32> to vector<8x1xi32>
    %152 = vector.broadcast %151 : vector<8x1xi32> to vector<8x96xi32>
    %153 = vector.broadcast %133 : vector<1x96xi32> to vector<8x96xi32>
    %154 = arith.cmpi eq, %152, %153 : vector<8x96xi32>
    %cst_41 = arith.constant 1.000000e+00 : f32
    %cst_42 = arith.constant 0.000000e+00 : f32
    %155 = vector.broadcast %cst_41 : f32 to vector<8x96xf32>
    %156 = vector.broadcast %cst_42 : f32 to vector<8x96xf32>
    %157 = arith.select %154, %155, %156 : vector<8x96xi1>, vector<8x96xf32>
    %158 = arith.addf %150, %157 : vector<8x96xf32>
    %159 = vector.extract_strided_slice %0 {offsets = [0, 19], sizes = [8, 1], strides = [1, 1]} : vector<8x23xi32> to vector<8x1xi32>
    %160 = vector.broadcast %159 : vector<8x1xi32> to vector<8x96xi32>
    %161 = vector.broadcast %133 : vector<1x96xi32> to vector<8x96xi32>
    %162 = arith.cmpi eq, %160, %161 : vector<8x96xi32>
    %cst_43 = arith.constant 1.000000e+00 : f32
    %cst_44 = arith.constant 0.000000e+00 : f32
    %163 = vector.broadcast %cst_43 : f32 to vector<8x96xf32>
    %164 = vector.broadcast %cst_44 : f32 to vector<8x96xf32>
    %165 = arith.select %162, %163, %164 : vector<8x96xi1>, vector<8x96xf32>
    %166 = arith.addf %158, %165 : vector<8x96xf32>
    %167 = vector.extract_strided_slice %0 {offsets = [0, 20], sizes = [8, 1], strides = [1, 1]} : vector<8x23xi32> to vector<8x1xi32>
    %168 = vector.broadcast %167 : vector<8x1xi32> to vector<8x96xi32>
    %169 = vector.broadcast %133 : vector<1x96xi32> to vector<8x96xi32>
    %170 = arith.cmpi eq, %168, %169 : vector<8x96xi32>
    %cst_45 = arith.constant 1.000000e+00 : f32
    %cst_46 = arith.constant 0.000000e+00 : f32
    %171 = vector.broadcast %cst_45 : f32 to vector<8x96xf32>
    %172 = vector.broadcast %cst_46 : f32 to vector<8x96xf32>
    %173 = arith.select %170, %171, %172 : vector<8x96xi1>, vector<8x96xf32>
    %174 = arith.addf %166, %173 : vector<8x96xf32>
    %175 = vector.extract_strided_slice %0 {offsets = [0, 21], sizes = [8, 1], strides = [1, 1]} : vector<8x23xi32> to vector<8x1xi32>
    %176 = vector.broadcast %175 : vector<8x1xi32> to vector<8x96xi32>
    %177 = vector.broadcast %133 : vector<1x96xi32> to vector<8x96xi32>
    %178 = arith.cmpi eq, %176, %177 : vector<8x96xi32>
    %cst_47 = arith.constant 1.000000e+00 : f32
    %cst_48 = arith.constant 0.000000e+00 : f32
    %179 = vector.broadcast %cst_47 : f32 to vector<8x96xf32>
    %180 = vector.broadcast %cst_48 : f32 to vector<8x96xf32>
    %181 = arith.select %178, %179, %180 : vector<8x96xi1>, vector<8x96xf32>
    %182 = arith.addf %174, %181 : vector<8x96xf32>
    %183 = vector.extract_strided_slice %0 {offsets = [0, 22], sizes = [8, 1], strides = [1, 1]} : vector<8x23xi32> to vector<8x1xi32>
    %184 = vector.broadcast %183 : vector<8x1xi32> to vector<8x96xi32>
    %185 = vector.broadcast %133 : vector<1x96xi32> to vector<8x96xi32>
    %186 = arith.cmpi eq, %184, %185 : vector<8x96xi32>
    %cst_49 = arith.constant 1.000000e+00 : f32
    %cst_50 = arith.constant 0.000000e+00 : f32
    %187 = vector.broadcast %cst_49 : f32 to vector<8x96xf32>
    %188 = vector.broadcast %cst_50 : f32 to vector<8x96xf32>
    %189 = arith.select %186, %187, %188 : vector<8x96xi1>, vector<8x96xf32>
    %190 = arith.addf %182, %189 : vector<8x96xf32>
    %c104 = arith.constant 104 : index
    %c0_51 = arith.constant 0 : index
    %191 = vector.load %arg3[%c104, %c0_51] : memref<200x32xf32, #tpu.memory_space<vmem>>, vector<96x32xf32>
    %cst_52 = arith.constant dense<0.000000e+00> : vector<8x32xf32>
    %192 = tpu.matmul %190, %191, %cst_52 {dimension_numbers = #tpu.dot_dimension_numbers<[1], [0], [0], [1], [0, 0, 1, 1], [], []>} : vector<8x96xf32>, vector<96x32xf32>, vector<8x32xf32> -> vector<8x32xf32>
    %c0_53 = arith.constant 0 : index
    %c0_54 = arith.constant 0 : index
    %193 = vector.load %arg4[%c0_53, %c0_54] : memref<48x128xf32, #tpu.memory_space<vmem>>, vector<32x128xf32>
    %c32 = arith.constant 32 : index
    %c0_55 = arith.constant 0 : index
    %194 = vector.load %arg4[%c32, %c0_55] : memref<48x128xf32, #tpu.memory_space<vmem>>, vector<8x128xf32>
    %c40 = arith.constant 40 : index
    %c0_56 = arith.constant 0 : index
    %195 = vector.load %arg4[%c40, %c0_56] : memref<48x128xf32, #tpu.memory_space<vmem>>, vector<1x128xf32>
    %c41 = arith.constant 41 : index
    %c0_57 = arith.constant 0 : index
    %196 = vector.load %arg4[%c41, %c0_57] : memref<48x128xf32, #tpu.memory_space<vmem>>, vector<1x64xf32>
    %c42 = arith.constant 42 : index
    %c0_58 = arith.constant 0 : index
    %197 = vector.load %arg4[%c42, %c0_58] : memref<48x128xf32, #tpu.memory_space<vmem>>, vector<1x32xf32>
    %c0_59 = arith.constant 0 : index
    %c0_60 = arith.constant 0 : index
    %198 = vector.load %arg5[%c0_59, %c0_60] : memref<160x64xf32, #tpu.memory_space<vmem>>, vector<128x64xf32>
    %c128 = arith.constant 128 : index
    %c0_61 = arith.constant 0 : index
    %199 = vector.load %arg5[%c128, %c0_61] : memref<160x64xf32, #tpu.memory_space<vmem>>, vector<32x32xf32>
    %cst_62 = arith.constant dense<0.000000e+00> : vector<8x128xf32>
    %200 = tpu.matmul %132, %193, %cst_62 {dimension_numbers = #tpu.dot_dimension_numbers<[1], [0], [0], [1], [0, 0, 1, 1], [], []>} : vector<8x32xf32>, vector<32x128xf32>, vector<8x128xf32> -> vector<8x128xf32>
    %c0_63 = arith.constant 0 : index
    %c0_64 = arith.constant 0 : index
    %201 = vector.load %arg2[%c0_63, %c0_64] : memref<8x8xf32, #tpu.memory_space<vmem>>, vector<8x8xf32>
    %cst_65 = arith.constant dense<0.000000e+00> : vector<8x128xf32>
    %202 = tpu.matmul %201, %194, %cst_65 {dimension_numbers = #tpu.dot_dimension_numbers<[1], [0], [0], [1], [0, 0, 1, 1], [], []>} : vector<8x8xf32>, vector<8x128xf32>, vector<8x128xf32> -> vector<8x128xf32>
    %203 = arith.addf %200, %202 : vector<8x128xf32>
    %204 = vector.broadcast %195 : vector<1x128xf32> to vector<8x128xf32>
    %205 = arith.addf %203, %204 : vector<8x128xf32>
    %cst_66 = arith.constant 0.000000e+00 : f32
    %206 = vector.broadcast %cst_66 : f32 to vector<8x128xf32>
    %207 = arith.maximumf %205, %206 : vector<8x128xf32>
    %cst_67 = arith.constant dense<0.000000e+00> : vector<8x64xf32>
    %208 = tpu.matmul %207, %198, %cst_67 {dimension_numbers = #tpu.dot_dimension_numbers<[1], [0], [0], [1], [0, 0, 1, 1], [], []>} : vector<8x128xf32>, vector<128x64xf32>, vector<8x64xf32> -> vector<8x64xf32>
    %209 = vector.broadcast %196 : vector<1x64xf32> to vector<8x64xf32>
    %210 = arith.addf %208, %209 : vector<8x64xf32>
    %211 = vector.extract_strided_slice %210 {offsets = [0, 0], sizes = [8, 32], strides = [1, 1]} : vector<8x64xf32> to vector<8x32xf32>
    %cst_68 = arith.constant 0.000000e+00 : f32
    %212 = vector.broadcast %cst_68 : f32 to vector<8x32xf32>
    %213 = arith.maximumf %211, %212 : vector<8x32xf32>
    %214 = vector.extract_strided_slice %210 {offsets = [0, 32], sizes = [8, 32], strides = [1, 1]} : vector<8x64xf32> to vector<8x32xf32>
    %cst_69 = arith.constant dense<0.000000e+00> : vector<8x32xf32>
    %215 = tpu.matmul %213, %199, %cst_69 {dimension_numbers = #tpu.dot_dimension_numbers<[1], [0], [0], [1], [0, 0, 1, 1], [], []>} : vector<8x32xf32>, vector<32x32xf32>, vector<8x32xf32> -> vector<8x32xf32>
    %216 = vector.broadcast %197 : vector<1x32xf32> to vector<8x32xf32>
    %217 = arith.addf %215, %216 : vector<8x32xf32>
    %218 = arith.addf %192, %214 : vector<8x32xf32>
    %219 = arith.mulf %217, %218 : vector<8x32xf32>
    %cst_70 = arith.constant dense<0.000000e+00> : vector<8xf32>
    %220 = vector.multi_reduction <add>, %219, %cst_70 [1] : vector<8x32xf32> to vector<8xf32>
    %221 = vector.shape_cast %220 : vector<8xf32> to vector<8x1xf32>
    %222 = vector.shape_cast %221 : vector<8x1xf32> to vector<8x1xf32>
    %223 = vector.broadcast %222 : vector<8x1xf32> to vector<8x8xf32>
    %c0_71 = arith.constant 0 : index
    %c0_72 = arith.constant 0 : index
    %224 = vector.load %arg6[%c0_71, %c0_72] : memref<8x8xf32, #tpu.memory_space<vmem>>, vector<8x8xf32>
    tpu.vector_store %arg6[%c0_71, %c0_72], %223 {strides = array<i32>} : memref<8x8xf32, #tpu.memory_space<vmem>>, vector<8x8xf32>,
    return
  }
  func.func @transform_0(%arg0: i32) -> (i32, i32) {
    %c0_i32 = arith.constant 0 : i32
    %c0_i32_0 = arith.constant 0 : i32
    return %arg0, %c0_i32 : i32, i32
  }
  func.func @transform_1(%arg0: i32) -> (i32, i32) {
    %c0_i32 = arith.constant 0 : i32
    %c0_i32_0 = arith.constant 0 : i32
    return %arg0, %c0_i32 : i32, i32
  }
  func.func @transform_2(%arg0: i32) -> (i32, i32) {
    %c0_i32 = arith.constant 0 : i32
    %c0_i32_0 = arith.constant 0 : i32
    %c0_i32_1 = arith.constant 0 : i32
    return %c0_i32, %c0_i32_0 : i32, i32
  }
  func.func @transform_3(%arg0: i32) -> (i32, i32) {
    %c0_i32 = arith.constant 0 : i32
    %c0_i32_0 = arith.constant 0 : i32
    %c0_i32_1 = arith.constant 0 : i32
    return %c0_i32, %c0_i32_0 : i32, i32
  }
  func.func @transform_4(%arg0: i32) -> (i32, i32) {
    %c0_i32 = arith.constant 0 : i32
    %c0_i32_0 = arith.constant 0 : i32
    %c0_i32_1 = arith.constant 0 : i32
    return %c0_i32, %c0_i32_0 : i32, i32
  }
  func.func @transform_5(%arg0: i32) -> (i32, i32) {
    %c0_i32 = arith.constant 0 : i32
    %c0_i32_0 = arith.constant 0 : i32
    return %arg0, %c0_i32 : i32, i32
  }
}

</mosaic_0001>

<llo_original>
// kernel: tpu_custom_call.1
$region0: #{tpu_custom_call.1}
  #allocation0 [shape = 'u32[]', space=smem, size = 0x4, offset = 0x4, fixed_abs, tag = 'smem constant byte address 0x4 - core index']
  #allocation1 [shape = 'u32[144,128]{1,0:T(1,128)}', space=vmem, size = 0x12000, scoped, tag = 'internal scratch']
  %s0 = inlined_call_operand.vmem [shape: s32[8,23], index: 0, kind: input, shape index: {}]
  %s1 = inlined_call_operand.vmem [shape: f32[8,8], index: 1, kind: input, shape index: {}]
  %s2 = inlined_call_operand.vmem [shape: f32[200,32], index: 2, kind: input, shape index: {}]
  %s3 = inlined_call_operand.vmem [shape: f32[48,128], index: 3, kind: input, shape index: {}]
  %s4 = inlined_call_operand.vmem [shape: f32[160,64], index: 4, kind: input, shape index: {}]
  %s5 = inlined_call_operand.hbm [shape: f32[8,8], index: 5, kind: output, shape index: {}]
  %s6 = sld [smem:[#allocation0]]
  $region30: #{tpu_custom_call.1} parent=0
    _
  %s8 = ssub.s32 1, %s6
  %s9 = scalar_select 0, %s8, %s6
  $region1: #{tpu_custom_call.1} parent=0
    #allocation2 [shape = 'u8[4096]{0}', space=vmem, size = 0x1000, scoped, tag = 'output window, operand 0, single buffered']
    #allocation3 [shape = 's32[1]{0}', space=sflag, size = 0x4, scoped, tag = 'scoped memory for tpu_custom_call.1']
    %10 = vsyncpa [#allocation3], 0
    // Predicated region
    $region2: #{tpu_custom_call.1} parent=1 // pred_check
      _
    $region3: #{tpu_custom_call.1} parent=1 // pred_check_branch
      %12 = sbr.rel (0) target = $region5
    $region4: #{tpu_custom_call.1} parent=1 // pred_region
      _
    $region5: #{tpu_custom_call.1} parent=1 // pred_fallthru
      _
    // Predicated region
    $region6: #{tpu_custom_call.1} parent=1 // pred_check
      _
    $region7: #{tpu_custom_call.1} parent=1 // pred_check_branch
      %14 = sbr.rel (0) target = $region9
    $region8: #{tpu_custom_call.1} parent=1 // pred_region
      _
    $region9: #{tpu_custom_call.1} parent=1 // pred_fallthru
      _
    // Predicated region
    $region10: #{tpu_custom_call.1} parent=1 // pred_check
      _
    $region11: #{tpu_custom_call.1} parent=1 // pred_check_branch
      %16 = sbr.rel (0) target = $region13
    $region12: #{tpu_custom_call.1} parent=1 // pred_region
      _
    $region13: #{tpu_custom_call.1} parent=1 // pred_fallthru
      _
    // Predicated region
    $region14: #{tpu_custom_call.1} parent=1 // pred_check
      _
    $region15: #{tpu_custom_call.1} parent=1 // pred_check_branch
      %18 = sbr.rel (0) target = $region17
    $region16: #{tpu_custom_call.1} parent=1 // pred_region
      _
    $region17: #{tpu_custom_call.1} parent=1 // pred_fallthru
      _
    // Predicated region
    $region18: #{tpu_custom_call.1} parent=1 // pred_check
      _
    $region19: #{tpu_custom_call.1} parent=1 // pred_check_branch
      %20 = sbr.rel (0) target = $region21
    $region20: #{tpu_custom_call.1} parent=1 // pred_region
      _
    $region21: #{tpu_custom_call.1} parent=1 // pred_fallthru
      _
    %v21 = vld [vmem:[%s0] sm:$0xff]
    %v22 = vlaneseq
    %v23 = vand.u32 %v22, 127
    %24 = vset.pattern.permute.xlu0 0
    %25 = vperm.xlu0 %24, %v21
    %v26 = vpop.permute.xlu0 %25
    %vm27 = vcmp.eq.s32.totalorder %v26, %v23
    %v28 = vsel %vm27, 1.0, 0.0
    %v29 = vadd.f32 %v28, 0.0
    %30 = vset.pattern.permute.xlu0 1
    %31 = vperm.xlu0 %30, %v21
    %v32 = vpop.permute.xlu0 %31
    %vm33 = vcmp.eq.s32.totalorder %v32, %v23
    %v34 = vsel %vm33, 1.0, 0.0
    %v35 = vadd.f32 %v29, %v34
    %36 = vset.pattern.permute.xlu0 2
    %37 = vperm.xlu0 %36, %v21
    %v38 = vpop.permute.xlu0 %37
    %vm39 = vcmp.eq.s32.totalorder %v38, %v23
    %v40 = vsel %vm39, 1.0, 0.0
    %v41 = vadd.f32 %v35, %v40
    %42 = vset.pattern.permute.xlu0 3
    %43 = vperm.xlu0 %42, %v21
    %v44 = vpop.permute.xlu0 %43
    %vm45 = vcmp.eq.s32.totalorder %v44, %v23
    %v46 = vsel %vm45, 1.0, 0.0
    %v47 = vadd.f32 %v41, %v46
    %48 = vset.pattern.permute.xlu0 4
    %49 = vperm.xlu0 %48, %v21
    %v50 = vpop.permute.xlu0 %49
    %vm51 = vcmp.eq.s32.totalorder %v50, %v23
    %v52 = vsel %vm51, 1.0, 0.0
    %v53 = vadd.f32 %v47, %v52
    %54 = vset.pattern.permute.xlu0 5
    %55 = vperm.xlu0 %54, %v21
    %v56 = vpop.permute.xlu0 %55
    %vm57 = vcmp.eq.s32.totalorder %v56, %v23
    %v58 = vsel %vm57, 1.0, 0.0
    %v59 = vadd.f32 %v53, %v58
    %60 = vset.pattern.permute.xlu0 6
    %61 = vperm.xlu0 %60, %v21
    %v62 = vpop.permute.xlu0 %61
    %vm63 = vcmp.eq.s32.totalorder %v62, %v23
    %v64 = vsel %vm63, 1.0, 0.0
    %v65 = vadd.f32 %v59, %v64
    %66 = vset.pattern.permute.xlu0 7
    %67 = vperm.xlu0 %66, %v21
    %v68 = vpop.permute.xlu0 %67
    %vm69 = vcmp.eq.s32.totalorder %v68, %v23
    %v70 = vsel %vm69, 1.0, 0.0
    %v71 = vadd.f32 %v65, %v70
    %72 = vset.pattern.permute.xlu0 8
    %73 = vperm.xlu0 %72, %v21
    %v74 = vpop.permute.xlu0 %73
    %vm75 = vcmp.eq.s32.totalorder %v74, %v23
    %v76 = vsel %vm75, 1.0, 0.0
    %v77 = vadd.f32 %v71, %v76
    %78 = vset.pattern.permute.xlu0 9
    %79 = vperm.xlu0 %78, %v21
    %v80 = vpop.permute.xlu0 %79
    %vm81 = vcmp.eq.s32.totalorder %v80, %v23
    %v82 = vsel %vm81, 1.0, 0.0
    %v83 = vadd.f32 %v77, %v82
    %84 = vset.pattern.permute.xlu0 10
    %85 = vperm.xlu0 %84, %v21
    %v86 = vpop.permute.xlu0 %85
    %vm87 = vcmp.eq.s32.totalorder %v86, %v23
    %v88 = vsel %vm87, 1.0, 0.0
    %v89 = vadd.f32 %v83, %v88
    %90 = vset.pattern.permute.xlu0 11
    %91 = vperm.xlu0 %90, %v21
    %v92 = vpop.permute.xlu0 %91
    %vm93 = vcmp.eq.s32.totalorder %v92, %v23
    %v94 = vsel %vm93, 1.0, 0.0
    %v95 = vadd.f32 %v89, %v94
    %96 = vset.pattern.permute.xlu0 12
    %97 = vperm.xlu0 %96, %v21
    %v98 = vpop.permute.xlu0 %97
    %vm99 = vcmp.eq.s32.totalorder %v98, %v23
    %v100 = vsel %vm99, 1.0, 0.0
    %v101 = vadd.f32 %v95, %v100
    %102 = vset.pattern.permute.xlu0 13
    %103 = vperm.xlu0 %102, %v21
    %v104 = vpop.permute.xlu0 %103
    %vm105 = vcmp.eq.s32.totalorder %v104, %v23
    %v106 = vsel %vm105, 1.0, 0.0
    %v107 = vadd.f32 %v101, %v106
    %108 = vset.pattern.permute.xlu0 14
    %109 = vperm.xlu0 %108, %v21
    %v110 = vpop.permute.xlu0 %109
    %vm111 = vcmp.eq.s32.totalorder %v110, %v23
    %v112 = vsel %vm111, 1.0, 0.0
    %v113 = vadd.f32 %v107, %v112
    %114 = vset.pattern.permute.xlu0 15
    %115 = vperm.xlu0 %114, %v21
    %v116 = vpop.permute.xlu0 %115
    %vm117 = vcmp.eq.s32.totalorder %v116, %v23
    %v118 = vsel %vm117, 1.0, 0.0
    %v119 = vadd.f32 %v113, %v118
    %v120 = vld [vmem:[%s2] sm:$0xff]
    %v121 = vld [vmem:[%s2 + $0x8] sm:$0xff]
    %v122 = vld [vmem:[%s2 + $0x10] sm:$0xff]
    %v123 = vld [vmem:[%s2 + $0x18] sm:$0xff]
    %v124 = vld [vmem:[%s2 + $0x20] sm:$0xff]
    %v125 = vld [vmem:[%s2 + $0x28] sm:$0xff]
    %v126 = vld [vmem:[%s2 + $0x30] sm:$0xff]
    %v127 = vld [vmem:[%s2 + $0x38] sm:$0xff]
    %v128 = vld [vmem:[%s2 + $0x40] sm:$0xff]
    %v129 = vld [vmem:[%s2 + $0x48] sm:$0xff]
    %v130 = vld [vmem:[%s2 + $0x50] sm:$0xff]
    %v131 = vld [vmem:[%s2 + $0x58] sm:$0xff]
    %v132 = vld [vmem:[%s2 + $0x60] sm:$0xff]
    %vm133 = vcmask 850944
    %v135 = vsel %vm133, %v119, 0
    %137 = vmatprep.subr.mxu0 0.0
    %138 = vmatpush1.msra.mxu0 %v120
    %139 = vmatprep.subr.mxu0 0.0
    %140 = vmatpush1.msra.mxu0 %v121
    %141 = vmatprep.subr.mxu0 0.0
    %142 = vmatpush1.msra.mxu0 %v122
    %143 = vmatprep.subr.mxu0 0.0
    %144 = vmatpush1.msra.mxu0 %v123
    %145 = vmatprep.subr.mxu0 0.0
    %146 = vmatpush1.msra.mxu0 %v124
    %147 = vmatprep.subr.mxu0 0.0
    %148 = vmatpush1.msra.mxu0 %v125
    %149 = vmatprep.subr.mxu0 0.0
    %150 = vmatpush1.msra.mxu0 %v126
    %151 = vmatprep.subr.mxu0 0.0
    %152 = vmatpush1.msra.mxu0 %v127
    %153 = vmatprep.subr.mxu0 0.0
    %154 = vmatpush1.msra.mxu0 %v128
    %155 = vmatprep.subr.mxu0 0.0
    %156 = vmatpush1.msra.mxu0 %v129
    %157 = vmatprep.subr.mxu0 0.0
    %158 = vmatpush1.msra.mxu0 %v130
    %159 = vmatprep.subr.mxu0 0.0
    %160 = vmatpush1.msra.mxu0 %v131
    %161 = vmatprep.subr.mxu0 0.0
    %162 = vmatpush1.msra.mxu0 %v132
    %163 = vmatprep.subr.mxu0 0.0
    %164 = vmatpush1.msra.mxu0 0.0
    %165 = vmatprep.subr.mxu0 0.0
    %166 = vmatpush1.msra.mxu0 0.0
    %167 = vmatprep.subr.mxu0 0.0
    %168 = vmatpush1.msra.mxu0 0.0
    %169 = vmatprep.subr.mxu0 0.0
    %170 = vmatpush1.msra.mxu0 0.0
    %171 = vmatprep.subr.mxu0 0.0
    %172 = vmatpush1.msra.mxu0 0.0
    %173 = vmatprep.subr.mxu0 0.0
    %174 = vmatpush1.msra.mxu0 0.0
    %175 = vmatprep.subr.mxu0 0.0
    %176 = vmatpush1.msra.mxu0 0.0
    %177 = vmatprep.subr.mxu0 0.0
    %178 = vmatpush1.msra.mxu0 0.0
    %179 = vmatprep.subr.mxu0 0.0
    %180 = vmatpush1.msra.mxu0 0.0
    %181 = vmatprep.subr.mxu0 0.0
    %182 = vmatpush1.msra.mxu0 0.0
    %183 = vmatprep.subr.mxu0 0.0
    %184 = vmatpush1.msra.mxu0 0.0
    %185 = vmatprep.subr.mxu0 0.0
    %186 = vmatpush1.msra.mxu0 0.0
    %187 = vmatprep.subr.mxu0 0.0
    %188 = vmatpush1.msra.mxu0 0.0
    %189 = vmatprep.subr.mxu0 0.0
    %190 = vmatpush1.msra.mxu0 0.0
    %191 = vmatprep.subr.mxu0 0.0
    %192 = vmatpush1.msra.mxu0 0.0
    %193 = vmatprep.subr.mxu0 0.0
    %194 = vmatpush1.msra.mxu0 0.0
    %195 = vmatprep.subr.mxu0 0.0
    %196 = vmatpush1.msra.mxu0 0.0
    %197 = vmatprep.subr.mxu0 0.0
    %198 = vmatpush1.msra.mxu0 0.0
    %199 = vmatprep.subr.mxu0 0.0
    %200 = vmatpush1.msra.mxu0 0.0
    %201 = vmatprep.mubr.f32.mxu0 0.0
    %202 = vmatmul.mubr.f32.gmra.mrb[0].mxu0 %v135
    %v203 = vpop.f32.mrb[0].mxu0
    %v204 = vadd.f32 0.0, %v203
    %v205 = vpop.f32.mrb[0].mxu0
    %206 = vdwg.mxu0
    %207 = vset.pattern.permute.xlu0 16
    %208 = vperm.xlu0 %207, %v21
    %v209 = vpop.permute.xlu0 %208
    %vm210 = vcmp.eq.s32.totalorder %v209, %v23
    %v211 = vsel %vm210, 1.0, 0.0
    %v212 = vadd.f32 %v211, 0.0
    %213 = vset.pattern.permute.xlu0 17
    %214 = vperm.xlu0 %213, %v21
    %v215 = vpop.permute.xlu0 %214
    %vm216 = vcmp.eq.s32.totalorder %v215, %v23
    %v217 = vsel %vm216, 1.0, 0.0
    %v218 = vadd.f32 %v212, %v217
    %219 = vset.pattern.permute.xlu0 18
    %220 = vperm.xlu0 %219, %v21
    %v221 = vpop.permute.xlu0 %220
    %vm222 = vcmp.eq.s32.totalorder %v221, %v23
    %v223 = vsel %vm222, 1.0, 0.0
    %v224 = vadd.f32 %v218, %v223
    %225 = vset.pattern.permute.xlu0 19
    %226 = vperm.xlu0 %225, %v21
    %v227 = vpop.permute.xlu0 %226
    %vm228 = vcmp.eq.s32.totalorder %v227, %v23
    %v229 = vsel %vm228, 1.0, 0.0
    %v230 = vadd.f32 %v224, %v229
    %231 = vset.pattern.permute.xlu0 20
    %232 = vperm.xlu0 %231, %v21
    %v233 = vpop.permute.xlu0 %232
    %vm234 = vcmp.eq.s32.totalorder %v233, %v23
    %v235 = vsel %vm234, 1.0, 0.0
    %v236 = vadd.f32 %v230, %v235
    %237 = vset.pattern.permute.xlu0 21
    %238 = vperm.xlu0 %237, %v21
    %v239 = vpop.permute.xlu0 %238
    %vm240 = vcmp.eq.s32.totalorder %v239, %v23
    %v241 = vsel %vm240, 1.0, 0.0
    %v242 = vadd.f32 %v236, %v241
    %243 = vset.pattern.permute.xlu0 22
    %244 = vperm.xlu0 %243, %v21
    %v245 = vpop.permute.xlu0 %244
    %vm246 = vcmp.eq.s32.totalorder %v245, %v23
    %v247 = vsel %vm246, 1.0, 0.0
    %v248 = vadd.f32 %v242, %v247
    %v249 = vld [vmem:[%s2 + $0x68] sm:$0xff]
    %v250 = vld [vmem:[%s2 + $0x70] sm:$0xff]
    %v251 = vld [vmem:[%s2 + $0x78] sm:$0xff]
    %v252 = vld [vmem:[%s2 + $0x80] sm:$0xff]
    %v253 = vld [vmem:[%s2 + $0x88] sm:$0xff]
    %v254 = vld [vmem:[%s2 + $0x90] sm:$0xff]
    %v255 = vld [vmem:[%s2 + $0x98] sm:$0xff]
    %v256 = vld [vmem:[%s2 + $0xa0] sm:$0xff]
    %v257 = vld [vmem:[%s2 + $0xa8] sm:$0xff]
    %v258 = vld [vmem:[%s2 + $0xb0] sm:$0xff]
    %v259 = vld [vmem:[%s2 + $0xb8] sm:$0xff]
    %v260 = vld [vmem:[%s2 + $0xc0] sm:$0xff]
    %v261 = vld [vmem:[%s3] sm:$0xff]
    %v262 = vld [vmem:[%s3 + $0x8] sm:$0xff]
    %v263 = vld [vmem:[%s3 + $0x10] sm:$0xff]
    %v264 = vld [vmem:[%s3 + $0x18] sm:$0xff]
    %v265 = vld [vmem:[%s3 + $0x20] sm:$0xff]
    %v266 = vld [vmem:[%s3 + $0x28] sm:$0x1]
    %v267 = vld [vmem:[%s3 + $0x29] sm:$0x1]
    %v268 = vld [vmem:[%s3 + $0x2a] sm:$0x1]
    %v269 = vld [vmem:[%s4] sm:$0xff]
    %v270 = vld [vmem:[%s4 + $0x8] sm:$0xff]
    %v271 = vld [vmem:[%s4 + $0x10] sm:$0xff]
    %v272 = vld [vmem:[%s4 + $0x18] sm:$0xff]
    %v273 = vld [vmem:[%s4 + $0x20] sm:$0xff]
    %v274 = vld [vmem:[%s4 + $0x28] sm:$0xff]
    %v275 = vld [vmem:[%s4 + $0x30] sm:$0xff]
    %v276 = vld [vmem:[%s4 + $0x38] sm:$0xff]
    %v277 = vld [vmem:[%s4 + $0x40] sm:$0xff]
    %v278 = vld [vmem:[%s4 + $0x48] sm:$0xff]
    %v279 = vld [vmem:[%s4 + $0x50] sm:$0xff]
    %v280 = vld [vmem:[%s4 + $0x58] sm:$0xff]
    %v281 = vld [vmem:[%s4 + $0x60] sm:$0xff]
    %v282 = vld [vmem:[%s4 + $0x68] sm:$0xff]
    %v283 = vld [vmem:[%s4 + $0x70] sm:$0xff]
    %v284 = vld [vmem:[%s4 + $0x78] sm:$0xff]
    %v285 = vld [vmem:[%s4 + $0x80] sm:$0xff]
    %v286 = vld [vmem:[%s4 + $0x88] sm:$0xff]
    %v287 = vld [vmem:[%s4 + $0x90] sm:$0xff]
    %v288 = vld [vmem:[%s4 + $0x98] sm:$0xff]
    %v289 = vld [vmem:[%s1] sm:$0xff]
    %vm290 = vcmask 64512
    %v292 = vsel %vm290, %v289, 0
    %294 = vmatprep.subr.mxu0 0.0
    %295 = vmatpush1.msra.mxu0 %v265
    %296 = vmatprep.subr.mxu0 0.0
    %297 = vmatpush1.msra.mxu0 0.0
    %298 = vmatprep.subr.mxu0 0.0
    %299 = vmatpush1.msra.mxu0 0.0
    %300 = vmatprep.subr.mxu0 0.0
    %301 = vmatpush1.msra.mxu0 0.0
    %302 = vmatprep.subr.mxu0 0.0
    %303 = vmatpush1.msra.mxu0 0.0
    %304 = vmatprep.subr.mxu0 0.0
    %305 = vmatpush1.msra.mxu0 0.0
    %306 = vmatprep.subr.mxu0 0.0
    %307 = vmatpush1.msra.mxu0 0.0
    %308 = vmatprep.subr.mxu0 0.0
    %309 = vmatpush1.msra.mxu0 0.0
    %310 = vmatprep.subr.mxu0 0.0
    %311 = vmatpush1.msra.mxu0 0.0
    %312 = vmatprep.subr.mxu0 0.0
    %313 = vmatpush1.msra.mxu0 0.0
    %314 = vmatprep.subr.mxu0 0.0
    %315 = vmatpush1.msra.mxu0 0.0
    %316 = vmatprep.subr.mxu0 0.0
    %317 = vmatpush1.msra.mxu0 0.0
    %318 = vmatprep.subr.mxu0 0.0
    %319 = vmatpush1.msra.mxu0 0.0
    %320 = vmatprep.subr.mxu0 0.0
    %321 = vmatpush1.msra.mxu0 0.0
    %322 = vmatprep.subr.mxu0 0.0
    %323 = vmatpush1.msra.mxu0 0.0
    %324 = vmatprep.subr.mxu0 0.0
    %325 = vmatpush1.msra.mxu0 0.0
    %326 = vmatprep.subr.mxu0 0.0
    %327 = vmatpush1.msra.mxu0 0.0
    %328 = vmatprep.subr.mxu0 0.0
    %329 = vmatpush1.msra.mxu0 0.0
    %330 = vmatprep.subr.mxu0 0.0
    %331 = vmatpush1.msra.mxu0 0.0
    %332 = vmatprep.subr.mxu0 0.0
    %333 = vmatpush1.msra.mxu0 0.0
    %334 = vmatprep.subr.mxu0 0.0
    %335 = vmatpush1.msra.mxu0 0.0
    %336 = vmatprep.subr.mxu0 0.0
    %337 = vmatpush1.msra.mxu0 0.0
    %338 = vmatprep.subr.mxu0 0.0
    %339 = vmatpush1.msra.mxu0 0.0
    %340 = vmatprep.subr.mxu0 0.0
    %341 = vmatpush1.msra.mxu0 0.0
    %342 = vmatprep.subr.mxu0 0.0
    %343 = vmatpush1.msra.mxu0 0.0
    %344 = vmatprep.subr.mxu0 0.0
    %345 = vmatpush1.msra.mxu0 0.0
    %346 = vmatprep.subr.mxu0 0.0
    %347 = vmatpush1.msra.mxu0 0.0
    %348 = vmatprep.subr.mxu0 0.0
    %349 = vmatpush1.msra.mxu0 0.0
    %350 = vmatprep.subr.mxu0 0.0
    %351 = vmatpush1.msra.mxu0 0.0
    %352 = vmatprep.subr.mxu0 0.0
    %353 = vmatpush1.msra.mxu0 0.0
    %354 = vmatprep.subr.mxu0 0.0
    %355 = vmatpush1.msra.mxu0 0.0
    %356 = vmatprep.subr.mxu0 0.0
    %357 = vmatpush1.msra.mxu0 0.0
    %358 = vmatprep.mubr.f32.mxu0 0.0
    %359 = vmatmul.mubr.f32.gmra.mrb[0].mxu0 %v292
    %v360 = vpop.f32.mrb[0].mxu0
    %v361 = vadd.f32 0.0, %v360
    %v362 = vpop.f32.mrb[0].mxu0
    %363 = vdwg.mxu0
    %vm364 = vcmask 261120
    %v366 = vsel %vm364, %v204, 0
    %368 = vmatprep.subr.mxu0 0.0
    %369 = vmatpush1.msra.mxu0 %v261
    %370 = vmatprep.subr.mxu0 0.0
    %371 = vmatpush1.msra.mxu0 %v262
    %372 = vmatprep.subr.mxu0 0.0
    %373 = vmatpush1.msra.mxu0 %v263
    %374 = vmatprep.subr.mxu0 0.0
    %375 = vmatpush1.msra.mxu0 %v264
    %376 = vmatprep.subr.mxu0 0.0
    %377 = vmatpush1.msra.mxu0 0.0
    %378 = vmatprep.subr.mxu0 0.0
    %379 = vmatpush1.msra.mxu0 0.0
    %380 = vmatprep.subr.mxu0 0.0
    %381 = vmatpush1.msra.mxu0 0.0
    %382 = vmatprep.subr.mxu0 0.0
    %383 = vmatpush1.msra.mxu0 0.0
    %384 = vmatprep.subr.mxu0 0.0
    %385 = vmatpush1.msra.mxu0 0.0
    %386 = vmatprep.subr.mxu0 0.0
    %387 = vmatpush1.msra.mxu0 0.0
    %388 = vmatprep.subr.mxu0 0.0
    %389 = vmatpush1.msra.mxu0 0.0
    %390 = vmatprep.subr.mxu0 0.0
    %391 = vmatpush1.msra.mxu0 0.0
    %392 = vmatprep.subr.mxu0 0.0
    %393 = vmatpush1.msra.mxu0 0.0
    %394 = vmatprep.subr.mxu0 0.0
    %395 = vmatpush1.msra.mxu0 0.0
    %396 = vmatprep.subr.mxu0 0.0
    %397 = vmatpush1.msra.mxu0 0.0
    %398 = vmatprep.subr.mxu0 0.0
    %399 = vmatpush1.msra.mxu0 0.0
    %400 = vmatprep.subr.mxu0 0.0
    %401 = vmatpush1.msra.mxu0 0.0
    %402 = vmatprep.subr.mxu0 0.0
    %403 = vmatpush1.msra.mxu0 0.0
    %404 = vmatprep.subr.mxu0 0.0
    %405 = vmatpush1.msra.mxu0 0.0
    %406 = vmatprep.subr.mxu0 0.0
    %407 = vmatpush1.msra.mxu0 0.0
    %408 = vmatprep.subr.mxu0 0.0
    %409 = vmatpush1.msra.mxu0 0.0
    %410 = vmatprep.subr.mxu0 0.0
    %411 = vmatpush1.msra.mxu0 0.0
    %412 = vmatprep.subr.mxu0 0.0
    %413 = vmatpush1.msra.mxu0 0.0
    %414 = vmatprep.subr.mxu0 0.0
    %415 = vmatpush1.msra.mxu0 0.0
    %416 = vmatprep.subr.mxu0 0.0
    %417 = vmatpush1.msra.mxu0 0.0
    %418 = vmatprep.subr.mxu0 0.0
    %419 = vmatpush1.msra.mxu0 0.0
    %420 = vmatprep.subr.mxu0 0.0
    %421 = vmatpush1.msra.mxu0 0.0
    %422 = vmatprep.subr.mxu0 0.0
    %423 = vmatpush1.msra.mxu0 0.0
    %424 = vmatprep.subr.mxu0 0.0
    %425 = vmatpush1.msra.mxu0 0.0
    %426 = vmatprep.subr.mxu0 0.0
    %427 = vmatpush1.msra.mxu0 0.0
    %428 = vmatprep.subr.mxu0 0.0
    %429 = vmatpush1.msra.mxu0 0.0
    %430 = vmatprep.subr.mxu0 0.0
    %431 = vmatpush1.msra.mxu0 0.0
    %432 = vmatprep.mubr.f32.mxu0 0.0
    %433 = vmatmul.mubr.f32.gmra.mrb[0].mxu0 %v366
    %v434 = vpop.f32.mrb[0].mxu0
    %v435 = vadd.f32 %v361, %v434
    %v436 = vpop.f32.mrb[0].mxu0
    %437 = vdwg.mxu0
    %v438 = vlaneseq
    %v439 = vshrl.u32 %v438, 7
    %v440 = vsub.s32 0, %v439
    %v441 = vrot.slane %v266, %v440
    %v442 = vadd.f32 %v435, %v441
    %v443 = vmax.f32 %v442, 0.0
    %v444 = vlaneseq
    %v445 = vshrl.u32 %v444, 7
    %v446 = vsub.s32 0, %v445
    %v447 = vrot.slane %v267, %v446
    %448 = vmatprep.subr.mxu0 0.0
    %449 = vmatpush1.msra.mxu0 %v269
    %450 = vmatprep.subr.mxu0 0.0
    %451 = vmatpush1.msra.mxu0 %v270
    %452 = vmatprep.subr.mxu0 0.0
    %453 = vmatpush1.msra.mxu0 %v271
    %454 = vmatprep.subr.mxu0 0.0
    %455 = vmatpush1.msra.mxu0 %v272
    %456 = vmatprep.subr.mxu0 0.0
    %457 = vmatpush1.msra.mxu0 %v273
    %458 = vmatprep.subr.mxu0 0.0
    %459 = vmatpush1.msra.mxu0 %v274
    %460 = vmatprep.subr.mxu0 0.0
    %461 = vmatpush1.msra.mxu0 %v275
    %462 = vmatprep.subr.mxu0 0.0
    %463 = vmatpush1.msra.mxu0 %v276
    %464 = vmatprep.subr.mxu0 0.0
    %465 = vmatpush1.msra.mxu0 %v277
    %466 = vmatprep.subr.mxu0 0.0
    %467 = vmatpush1.msra.mxu0 %v278
    %468 = vmatprep.subr.mxu0 0.0
    %469 = vmatpush1.msra.mxu0 %v279
    %470 = vmatprep.subr.mxu0 0.0
    %471 = vmatpush1.msra.mxu0 %v280
    %472 = vmatprep.subr.mxu0 0.0
    %473 = vmatpush1.msra.mxu0 %v281
    %474 = vmatprep.subr.mxu0 0.0
    %475 = vmatpush1.msra.mxu0 %v282
    %476 = vmatprep.subr.mxu0 0.0
    %477 = vmatpush1.msra.mxu0 %v283
    %478 = vmatprep.subr.mxu0 0.0
    %479 = vmatpush1.msra.mxu0 %v284
    %480 = vmatprep.subr.mxu0 0.0
    %481 = vmatpush1.msra.mxu0 0.0
    %482 = vmatprep.subr.mxu0 0.0
    %483 = vmatpush1.msra.mxu0 0.0
    %484 = vmatprep.subr.mxu0 0.0
    %485 = vmatpush1.msra.mxu0 0.0
    %486 = vmatprep.subr.mxu0 0.0
    %487 = vmatpush1.msra.mxu0 0.0
    %488 = vmatprep.subr.mxu0 0.0
    %489 = vmatpush1.msra.mxu0 0.0
    %490 = vmatprep.subr.mxu0 0.0
    %491 = vmatpush1.msra.mxu0 0.0
    %492 = vmatprep.subr.mxu0 0.0
    %493 = vmatpush1.msra.mxu0 0.0
    %494 = vmatprep.subr.mxu0 0.0
    %495 = vmatpush1.msra.mxu0 0.0
    %496 = vmatprep.subr.mxu0 0.0
    %497 = vmatpush1.msra.mxu0 0.0
    %498 = vmatprep.subr.mxu0 0.0
    %499 = vmatpush1.msra.mxu0 0.0
    %500 = vmatprep.subr.mxu0 0.0
    %501 = vmatpush1.msra.mxu0 0.0
    %502 = vmatprep.subr.mxu0 0.0
    %503 = vmatpush1.msra.mxu0 0.0
    %504 = vmatprep.subr.mxu0 0.0
    %505 = vmatpush1.msra.mxu0 0.0
    %506 = vmatprep.subr.mxu0 0.0
    %507 = vmatpush1.msra.mxu0 0.0
    %508 = vmatprep.subr.mxu0 0.0
    %509 = vmatpush1.msra.mxu0 0.0
    %510 = vmatprep.subr.mxu0 0.0
    %511 = vmatpush1.msra.mxu0 0.0
    %512 = vmatprep.mubr.f32.mxu0 0.0
    %513 = vmatmul.mubr.f32.gmra.mrb[0].mxu0 %v443
    %v514 = vpop.f32.mrb[0].mxu0
    %v515 = vadd.f32 %v447, %v514
    %v516 = vpop.f32.mrb[0].mxu0
    %517 = vdwg.mxu0
    %v518 = vmax.f32 %v515, 0.0
    %v519 = vlaneseq
    %v520 = vshrl.u32 %v519, 7
    %v521 = vsub.s32 0, %v520
    %v522 = vrot.slane %v268, %v521
    %v524 = vsel %vm364, %v518, 0
    %526 = vmatprep.subr.mxu0 0.0
    %527 = vmatpush1.msra.mxu0 %v285
    %528 = vmatprep.subr.mxu0 0.0
    %529 = vmatpush1.msra.mxu0 %v286
    %530 = vmatprep.subr.mxu0 0.0
    %531 = vmatpush1.msra.mxu0 %v287
    %532 = vmatprep.subr.mxu0 0.0
    %533 = vmatpush1.msra.mxu0 %v288
    %534 = vmatprep.subr.mxu0 0.0
    %535 = vmatpush1.msra.mxu0 0.0
    %536 = vmatprep.subr.mxu0 0.0
    %537 = vmatpush1.msra.mxu0 0.0
    %538 = vmatprep.subr.mxu0 0.0
    %539 = vmatpush1.msra.mxu0 0.0
    %540 = vmatprep.subr.mxu0 0.0
    %541 = vmatpush1.msra.mxu0 0.0
    %542 = vmatprep.subr.mxu0 0.0
    %543 = vmatpush1.msra.mxu0 0.0
    %544 = vmatprep.subr.mxu0 0.0
    %545 = vmatpush1.msra.mxu0 0.0
    %546 = vmatprep.subr.mxu0 0.0
    %547 = vmatpush1.msra.mxu0 0.0
    %548 = vmatprep.subr.mxu0 0.0
    %549 = vmatpush1.msra.mxu0 0.0
    %550 = vmatprep.subr.mxu0 0.0
    %551 = vmatpush1.msra.mxu0 0.0
    %552 = vmatprep.subr.mxu0 0.0
    %553 = vmatpush1.msra.mxu0 0.0
    %554 = vmatprep.subr.mxu0 0.0
    %555 = vmatpush1.msra.mxu0 0.0
    %556 = vmatprep.subr.mxu0 0.0
    %557 = vmatpush1.msra.mxu0 0.0
    %558 = vmatprep.subr.mxu0 0.0
    %559 = vmatpush1.msra.mxu0 0.0
    %560 = vmatprep.subr.mxu0 0.0
    %561 = vmatpush1.msra.mxu0 0.0
    %562 = vmatprep.subr.mxu0 0.0
    %563 = vmatpush1.msra.mxu0 0.0
    %564 = vmatprep.subr.mxu0 0.0
    %565 = vmatpush1.msra.mxu0 0.0
    %566 = vmatprep.subr.mxu0 0.0
    %567 = vmatpush1.msra.mxu0 0.0
    %568 = vmatprep.subr.mxu0 0.0
    %569 = vmatpush1.msra.mxu0 0.0
    %570 = vmatprep.subr.mxu0 0.0
    %571 = vmatpush1.msra.mxu0 0.0
    %572 = vmatprep.subr.mxu0 0.0
    %573 = vmatpush1.msra.mxu0 0.0
    %574 = vmatprep.subr.mxu0 0.0
    %575 = vmatpush1.msra.mxu0 0.0
    %576 = vmatprep.subr.mxu0 0.0
    %577 = vmatpush1.msra.mxu0 0.0
    %578 = vmatprep.subr.mxu0 0.0
    %579 = vmatpush1.msra.mxu0 0.0
    %580 = vmatprep.subr.mxu0 0.0
    %581 = vmatpush1.msra.mxu0 0.0
    %582 = vmatprep.subr.mxu0 0.0
    %583 = vmatpush1.msra.mxu0 0.0
    %584 = vmatprep.subr.mxu0 0.0
    %585 = vmatpush1.msra.mxu0 0.0
    %586 = vmatprep.subr.mxu0 0.0
    %587 = vmatpush1.msra.mxu0 0.0
    %588 = vmatprep.subr.mxu0 0.0
    %589 = vmatpush1.msra.mxu0 0.0
    %590 = vmatprep.mubr.f32.mxu0 0.0
    %591 = vmatmul.mubr.f32.gmra.mrb[0].mxu0 %v524
    %v592 = vpop.f32.mrb[0].mxu0
    %v593 = vadd.f32 %v522, %v592
    %v594 = vpop.f32.mrb[0].mxu0
    %595 = vdwg.mxu0
    %597 = vrot.lane.b32.xlu0 %v515, 96
    %v598 = vpop.permute.xlu0 %597
    %vm600 = vcmask 785408
    %v602 = vsel %vm600, %v248, 0
    %604 = vmatprep.subr.mxu0 0.0
    %605 = vmatpush1.msra.mxu0 %v249
    %606 = vmatprep.subr.mxu0 0.0
    %607 = vmatpush1.msra.mxu0 %v250
    %608 = vmatprep.subr.mxu0 0.0
    %609 = vmatpush1.msra.mxu0 %v251
    %610 = vmatprep.subr.mxu0 0.0
    %611 = vmatpush1.msra.mxu0 %v252
    %612 = vmatprep.subr.mxu0 0.0
    %613 = vmatpush1.msra.mxu0 %v253
    %614 = vmatprep.subr.mxu0 0.0
    %615 = vmatpush1.msra.mxu0 %v254
    %616 = vmatprep.subr.mxu0 0.0
    %617 = vmatpush1.msra.mxu0 %v255
    %618 = vmatprep.subr.mxu0 0.0
    %619 = vmatpush1.msra.mxu0 %v256
    %620 = vmatprep.subr.mxu0 0.0
    %621 = vmatpush1.msra.mxu0 %v257
    %622 = vmatprep.subr.mxu0 0.0
    %623 = vmatpush1.msra.mxu0 %v258
    %624 = vmatprep.subr.mxu0 0.0
    %625 = vmatpush1.msra.mxu0 %v259
    %626 = vmatprep.subr.mxu0 0.0
    %627 = vmatpush1.msra.mxu0 %v260
    %628 = vmatprep.subr.mxu0 0.0
    %629 = vmatpush1.msra.mxu0 0.0
    %630 = vmatprep.subr.mxu0 0.0
    %631 = vmatpush1.msra.mxu0 0.0
    %632 = vmatprep.subr.mxu0 0.0
    %633 = vmatpush1.msra.mxu0 0.0
    %634 = vmatprep.subr.mxu0 0.0
    %635 = vmatpush1.msra.mxu0 0.0
    %636 = vmatprep.subr.mxu0 0.0
    %637 = vmatpush1.msra.mxu0 0.0
    %638 = vmatprep.subr.mxu0 0.0
    %639 = vmatpush1.msra.mxu0 0.0
    %640 = vmatprep.subr.mxu0 0.0
    %641 = vmatpush1.msra.mxu0 0.0
    %642 = vmatprep.subr.mxu0 0.0
    %643 = vmatpush1.msra.mxu0 0.0
    %644 = vmatprep.subr.mxu0 0.0
    %645 = vmatpush1.msra.mxu0 0.0
    %646 = vmatprep.subr.mxu0 0.0
    %647 = vmatpush1.msra.mxu0 0.0
    %648 = vmatprep.subr.mxu0 0.0
    %649 = vmatpush1.msra.mxu0 0.0
    %650 = vmatprep.subr.mxu0 0.0
    %651 = vmatpush1.msra.mxu0 0.0
    %652 = vmatprep.subr.mxu0 0.0
    %653 = vmatpush1.msra.mxu0 0.0
    %654 = vmatprep.subr.mxu0 0.0
    %655 = vmatpush1.msra.mxu0 0.0
    %656 = vmatprep.subr.mxu0 0.0
    %657 = vmatpush1.msra.mxu0 0.0
    %658 = vmatprep.subr.mxu0 0.0
    %659 = vmatpush1.msra.mxu0 0.0
    %660 = vmatprep.subr.mxu0 0.0
    %661 = vmatpush1.msra.mxu0 0.0
    %662 = vmatprep.subr.mxu0 0.0
    %663 = vmatpush1.msra.mxu0 0.0
    %664 = vmatprep.subr.mxu0 0.0
    %665 = vmatpush1.msra.mxu0 0.0
    %666 = vmatprep.subr.mxu0 0.0
    %667 = vmatpush1.msra.mxu0 0.0
    %668 = vmatprep.mubr.f32.mxu0 0.0
    %669 = vmatmul.mubr.f32.gmra.mrb[0].mxu0 %v602
    %v670 = vpop.f32.mrb[0].mxu0
    %v671 = vadd.f32 %v598, %v670
    %v672 = vpop.f32.mrb[0].mxu0
    %673 = vdwg.mxu0
    %v674 = vmul.f32 %v593, %v671
    %v675 = vsel %vm364, %v674, 0.0
    %676 = vadd.xlane.f32.xlu0 %v675
    %v677 = vpop.xlane.xlu0 %676
    %678 = vst.msk [vmem:[#allocation2] sm:$0xff] %vm290, %v677
    // Predicated region
    $region22: #{tpu_custom_call.1} parent=1 // pred_check
      _
    $region23: #{tpu_custom_call.1} parent=1 // pred_check_branch
      %680 = sbr.rel (0) target = $region25
    $region24: #{tpu_custom_call.1} parent=1 // pred_region
      %s682 = ssub.s32 128, 128
      %683 = vsyncadd [#allocation3], %s682
      %s685 = sshll.u32 [#allocation2], 4
      %s686 = int_to_ptr.vmem [resolvable:$true] %s685
      %688 = dma.vmem_to_hbm [thread:$0]  %s686, 128, %s5, [#allocation3]
    $region25: #{tpu_custom_call.1} parent=1 // pred_fallthru
      _
    // Predicated region
    $region26: #{tpu_custom_call.1} parent=1 // pred_check
      _
    $region27: #{tpu_custom_call.1} parent=1 // pred_check_branch
      %690 = sbr.rel (0) target = $region29
    $region28: #{tpu_custom_call.1} parent=1 // pred_region
      %691 = dma.done [#allocation3], 128
    $region29: #{tpu_custom_call.1} parent=1 // pred_fallthru
      _
    %692 = vsyncpa [#allocation3], 1

</llo_original>
